<compile_context>
chip_gen: v7x
topology: tpu7x:2x2x1
jax: 0.10.0
libtpu: 0.0.40
codegen_flags: <defaults>
</compile_context>

<pallas_src>
import math
import numpy as np

import jax
import jax.numpy as jnp
from jax.experimental import pallas as pl
from jax.experimental.pallas import tpu as pltpu

EMB_DIM = 64
POS_EMB_DIM = EMB_DIM // 4      # 16
HALF_DIM = POS_EMB_DIM // 2     # 8
MAX_PERIOD = 10000.0
DOWNSCALE_FREQ_SHIFT = 1.0
LANE = 128

# Frequency column (built in the wrapper, passed as a kernel operand).
_SCALE = math.log(MAX_PERIOD) / (HALF_DIM - DOWNSCALE_FREQ_SHIFT)
FREQS_COL = np.exp(-_SCALE * np.arange(HALF_DIM, dtype=np.float64)) \
              .reshape(HALF_DIM, 1).astype(np.float32)


def time_embedding_kernel(t_ref, f_ref, w1s_ref, w1c_ref, b1_ref, w2_ref,
                          b2_ref, o_ref):
    # t_ref : (1, TB)        time, samples on lanes (lane-dense)
    # f_ref : (8, 1)         sinusoidal frequencies
    # w1s/w1c: (64, 8)       W1[:, :8] / W1[:, 8:]  (PyTorch (out, in) layout)
    # b1/b2 : (64, 1)        bias columns
    # w2    : (64, 64)
    # o_ref : (64, TB)       transposed output (features x samples)
    t = t_ref[...]                                   # (1, TB)

    # --- SinusoidalPosEmb, transposed: arg[k, s] = t[s] * freq[k] ---
    a = f_ref[...] * t                               # (8, TB) outer product

    # --- Linear(16, 64): split into sin-half and cos-half matmuls so no
    #     concatenate / relayout is needed inside the kernel ---
    h = (jnp.dot(w1s_ref[...], jnp.sin(a), preferred_element_type=jnp.float32)
         + jnp.dot(w1c_ref[...], jnp.cos(a), preferred_element_type=jnp.float32)
         + b1_ref[...])                              # (64, TB)

    # --- SiLU / SWISH on full 128-lane vregs ---
    h = h * jax.nn.sigmoid(h)

    # --- Linear(64, 64) ---
    o = jnp.dot(w2_ref[...], h, preferred_element_type=jnp.float32) + b2_ref[...]
    o_ref[...] = o.astype(o_ref.dtype)               # lane-dense unmasked store


def _round_up(x, m):
    return ((x + m - 1) // m) * m


def time_embedding_transposed(time, w1, b1, w2, b2, *, tb_max=8192):
    """time: (B,) -> (EMB_DIM, B_pad) f32, transposed layout (B_pad >= B).

    w1: (64, 16), w2: (64, 64) in PyTorch nn.Linear (out_features, in_features)
    layout; b1, b2: (64,).  Columns >= B of the result are padding garbage.
    """
    B = time.shape[0]

    # Tile sizing: samples-per-step TB is a multiple of 128 (lane granularity);
    # keep >= 2 and an even number of grid steps so megacore ("parallel")
    # sharding on v7x has balanced work on both TensorCores.
    tb_max = max(LANE, _round_up(tb_max, LANE))
    B_pad = _round_up(max(B, 1), 2 * LANE)
    TB = min(tb_max, B_pad // 2)
    n_steps = -(-B_pad // TB)
    if n_steps % 2:
        n_steps += 1
    B_pad = n_steps * TB

    # Lane-dense time row (4 B/sample of HBM traffic).
    t = time.astype(jnp.float32)
    if B_pad != B:
        t = jnp.pad(t, (0, B_pad - B))
    t_row = t.reshape(1, B_pad)

    f_col = jnp.asarray(FREQS_COL)                       # (8, 1)
    w1f = w1.astype(jnp.float32)
    w1s = w1f[:, :HALF_DIM]                              # (64, 8) sin half
    w1c = w1f[:, HALF_DIM:]                              # (64, 8) cos half
    w2f = w2.astype(jnp.float32)                         # (64, 64)
    b1c = b1.astype(jnp.float32).reshape(EMB_DIM, 1)
    b2c = b2.astype(jnp.float32).reshape(EMB_DIM, 1)

    flops = (2 * B_pad * (POS_EMB_DIM * EMB_DIM + EMB_DIM * EMB_DIM)
             + 8 * B_pad * EMB_DIM + 2 * B_pad * HALF_DIM)
    transcendentals = B_pad * (POS_EMB_DIM + EMB_DIM)        # sin/cos + sigmoid
    bytes_accessed = 4 * (B_pad                              # time (lane-dense)
                          + EMB_DIM * B_pad                  # output
                          + POS_EMB_DIM * EMB_DIM + EMB_DIM * EMB_DIM
                          + 2 * EMB_DIM + HALF_DIM)          # resident params

    return pl.pallas_call(
        time_embedding_kernel,
        out_shape=jax.ShapeDtypeStruct((EMB_DIM, B_pad), jnp.float32),
        grid_spec=pltpu.PrefetchScalarGridSpec(
            num_scalar_prefetch=0,
            grid=(n_steps,),
            in_specs=[
                pl.BlockSpec((1, TB), lambda i: (0, i)),              # time
                # parameters: same block every step -> stay VMEM-resident
                pl.BlockSpec((HALF_DIM, 1), lambda i: (0, 0)),        # freqs
                pl.BlockSpec((EMB_DIM, HALF_DIM), lambda i: (0, 0)),  # W1 sin
                pl.BlockSpec((EMB_DIM, HALF_DIM), lambda i: (0, 0)),  # W1 cos
                pl.BlockSpec((EMB_DIM, 1), lambda i: (0, 0)),         # b1
                pl.BlockSpec((EMB_DIM, EMB_DIM), lambda i: (0, 0)),   # W2
                pl.BlockSpec((EMB_DIM, 1), lambda i: (0, 0)),         # b2
            ],
            out_specs=pl.BlockSpec((EMB_DIM, TB), lambda i: (0, i)),
        ),
        compiler_params=pltpu.CompilerParams(
            dimension_semantics=("parallel",),
            vmem_limit_bytes=64 * 1024 * 1024),
        cost_estimate=pl.CostEstimate(
            flops=flops,
            transcendentals=transcendentals,
            bytes_accessed=bytes_accessed),
    )(t_row, f_col, w1s, w1c, b1c, w2f, b2c)


def time_embedding(time, w1, b1, w2, b2, *, tb_max=8192):
    """time: (B,) -> (B, EMB_DIM) f32 -- the PyTorch TimeEmbedding contract.

    Prefer time_embedding_transposed() downstream: the transpose below is one
    extra XLA pass over the output in HBM.
    """
    B = time.shape[0]
    out_t = time_embedding_transposed(time, w1, b1, w2, b2, tb_max=tb_max)
    return out_t[:, :B].T


def _reference(time, w1, b1, w2, b2):
    half = HALF_DIM
    scale = math.log(MAX_PERIOD) / (half - DOWNSCALE_FREQ_SHIFT)
    freqs = jnp.exp(-scale * jnp.arange(half, dtype=jnp.float32))
    arg = time.astype(jnp.float32)[:, None] * freqs[None, :]
    pos = jnp.concatenate([jnp.sin(arg), jnp.cos(arg)], axis=-1)
    hp = jax.lax.Precision.HIGHEST
    h = jnp.dot(pos, w1.T, precision=hp) + b1
    h = h * jax.nn.sigmoid(h)
    return jnp.dot(h, w2.T, precision=hp) + b2


if __name__ == "__main__":
    key = jax.random.PRNGKey(0)
    k_t, k_w1, k_b1, k_w2, k_b2 = jax.random.split(key, 5)

    # PyTorch nn.Linear (out_features, in_features) layout.
    w1 = jax.random.normal(k_w1, (EMB_DIM, POS_EMB_DIM), jnp.float32) * 0.1
    b1 = jax.random.normal(k_b1, (EMB_DIM,), jnp.float32) * 0.1
    w2 = jax.random.normal(k_w2, (EMB_DIM, EMB_DIM), jnp.float32) * 0.1
    b2 = jax.random.normal(k_b2, (EMB_DIM,), jnp.float32) * 0.1

    # small case (B=8; padded to two 128-sample grid steps)
    B = 8
    time = jax.random.uniform(k_t, (B,), jnp.float32, 0.0, 1000.0)
    out = time_embedding(time, w1, b1, w2, b2)
    jax.block_until_ready(out)
    ref = _reference(time, w1, b1, w2, b2)
    assert out.shape == (B, EMB_DIM)
    assert jnp.allclose(out, ref, atol=5e-4, rtol=1e-4), "mismatch vs reference (B=8)"

    # multi-step grid + padding + native transposed layout
    B2 = 200
    time2 = jax.random.uniform(jax.random.PRNGKey(1), (B2,), jnp.float32, 0.0, 1000.0)
    out2_t = time_embedding_transposed(time2, w1, b1, w2, b2, tb_max=128)
    jax.block_until_ready(out2_t)
    ref2 = _reference(time2, w1, b1, w2, b2)
    assert out2_t.shape[0] == EMB_DIM and out2_t.shape[1] >= B2
    assert jnp.allclose(out2_t[:, :B2].T, ref2, atol=5e-4, rtol=1e-4), \
        "mismatch vs reference (B=200)"

    print("KERNEL_OK")
</pallas_src>

<mosaic_0001>
module attributes {stable_mosaic.version = 11 : i64} {
  func.func @time_embedding_kernel(%arg0: i32, %arg1: memref<1x128xf32, #tpu.memory_space<vmem>>, %arg2: memref<8x1xf32, #tpu.memory_space<vmem>>, %arg3: memref<64x8xf32, #tpu.memory_space<vmem>>, %arg4: memref<64x8xf32, #tpu.memory_space<vmem>>, %arg5: memref<64x1xf32, #tpu.memory_space<vmem>>, %arg6: memref<64x64xf32, #tpu.memory_space<vmem>>, %arg7: memref<64x1xf32, #tpu.memory_space<vmem>>, %arg8: memref<64x128xf32, #tpu.memory_space<vmem>>) attributes {dimension_semantics = [#tpu.dimension_semantics<parallel>], iteration_bounds = array<i64: 2>, scalar_prefetch = 0 : i64, scratch_operands = 0 : i64, tpu.core_type = #tpu.core_type<tc>, window_params = [{transform_indices = @transform_0, window_bounds = array<i64: 1, 128>}, {pipeline_mode = #tpu.pipeline_mode<synchronous>, transform_indices = @transform_1, window_bounds = array<i64: 8, 1>}, {pipeline_mode = #tpu.pipeline_mode<synchronous>, transform_indices = @transform_2, window_bounds = array<i64: 64, 8>}, {pipeline_mode = #tpu.pipeline_mode<synchronous>, transform_indices = @transform_3, window_bounds = array<i64: 64, 8>}, {pipeline_mode = #tpu.pipeline_mode<synchronous>, transform_indices = @transform_4, window_bounds = array<i64: 64, 1>}, {pipeline_mode = #tpu.pipeline_mode<synchronous>, transform_indices = @transform_5, window_bounds = array<i64: 64, 64>}, {pipeline_mode = #tpu.pipeline_mode<synchronous>, transform_indices = @transform_6, window_bounds = array<i64: 64, 1>}, {transform_indices = @transform_7, window_bounds = array<i64: 64, 128>}]} {
    %c0 = arith.constant 0 : index
    %c0_0 = arith.constant 0 : index
    %0 = vector.load %arg1[%c0, %c0_0] : memref<1x128xf32, #tpu.memory_space<vmem>>, vector<1x128xf32>
    %c0_1 = arith.constant 0 : index
    %c0_2 = arith.constant 0 : index
    %1 = vector.load %arg2[%c0_1, %c0_2] : memref<8x1xf32, #tpu.memory_space<vmem>>, vector<8x1xf32>
    %2 = vector.broadcast %1 : vector<8x1xf32> to vector<8x128xf32>
    %3 = vector.broadcast %0 : vector<1x128xf32> to vector<8x128xf32>
    %4 = arith.mulf %2, %3 : vector<8x128xf32>
    %c0_3 = arith.constant 0 : index
    %c0_4 = arith.constant 0 : index
    %5 = vector.load %arg3[%c0_3, %c0_4] : memref<64x8xf32, #tpu.memory_space<vmem>>, vector<64x8xf32>
    %6 = math.sin %4 : vector<8x128xf32>
    %cst = arith.constant dense<0.000000e+00> : vector<64x128xf32>
    %7 = tpu.matmul %5, %6, %cst {dimension_numbers = #tpu.dot_dimension_numbers<[1], [0], [0], [1], [0, 0, 1, 1], [], []>} : vector<64x8xf32>, vector<8x128xf32>, vector<64x128xf32> -> vector<64x128xf32>
    %c0_5 = arith.constant 0 : index
    %c0_6 = arith.constant 0 : index
    %8 = vector.load %arg4[%c0_5, %c0_6] : memref<64x8xf32, #tpu.memory_space<vmem>>, vector<64x8xf32>
    %9 = math.cos %4 : vector<8x128xf32>
    %cst_7 = arith.constant dense<0.000000e+00> : vector<64x128xf32>
    %10 = tpu.matmul %8, %9, %cst_7 {dimension_numbers = #tpu.dot_dimension_numbers<[1], [0], [0], [1], [0, 0, 1, 1], [], []>} : vector<64x8xf32>, vector<8x128xf32>, vector<64x128xf32> -> vector<64x128xf32>
    %11 = arith.addf %7, %10 : vector<64x128xf32>
    %c0_8 = arith.constant 0 : index
    %c0_9 = arith.constant 0 : index
    %12 = vector.load %arg5[%c0_8, %c0_9] : memref<64x1xf32, #tpu.memory_space<vmem>>, vector<64x1xf32>
    %13 = vector.broadcast %12 : vector<64x1xf32> to vector<64x128xf32>
    %14 = arith.addf %11, %13 : vector<64x128xf32>
    %15 = arith.negf %14 : vector<64x128xf32>
    %16 = math.exp %15 : vector<64x128xf32>
    %cst_10 = arith.constant 1.000000e+00 : f32
    %17 = vector.broadcast %cst_10 : f32 to vector<64x128xf32>
    %18 = arith.addf %17, %16 : vector<64x128xf32>
    %19 = arith.divf %17, %18 : vector<64x128xf32>
    %20 = arith.mulf %14, %19 : vector<64x128xf32>
    %c0_11 = arith.constant 0 : index
    %c0_12 = arith.constant 0 : index
    %21 = vector.load %arg6[%c0_11, %c0_12] : memref<64x64xf32, #tpu.memory_space<vmem>>, vector<64x64xf32>
    %cst_13 = arith.constant dense<0.000000e+00> : vector<64x128xf32>
    %22 = tpu.matmul %21, %20, %cst_13 {dimension_numbers = #tpu.dot_dimension_numbers<[1], [0], [0], [1], [0, 0, 1, 1], [], []>} : vector<64x64xf32>, vector<64x128xf32>, vector<64x128xf32> -> vector<64x128xf32>
    %c0_14 = arith.constant 0 : index
    %c0_15 = arith.constant 0 : index
    %23 = vector.load %arg7[%c0_14, %c0_15] : memref<64x1xf32, #tpu.memory_space<vmem>>, vector<64x1xf32>
    %24 = vector.broadcast %23 : vector<64x1xf32> to vector<64x128xf32>
    %25 = arith.addf %22, %24 : vector<64x128xf32>
    %c0_16 = arith.constant 0 : index
    %c0_17 = arith.constant 0 : index
    %26 = vector.load %arg8[%c0_16, %c0_17] : memref<64x128xf32, #tpu.memory_space<vmem>>, vector<64x128xf32>
    tpu.vector_store %arg8[%c0_16, %c0_17], %25 {strides = array<i32>} : memref<64x128xf32, #tpu.memory_space<vmem>>, vector<64x128xf32>,
    return
  }
  func.func @transform_0(%arg0: i32) -> (i32, i32) {
    %c0_i32 = arith.constant 0 : i32
    %c0_i32_0 = arith.constant 0 : i32
    return %c0_i32, %arg0 : i32, i32
  }
  func.func @transform_1(%arg0: i32) -> (i32, i32) {
    %c0_i32 = arith.constant 0 : i32
    %c0_i32_0 = arith.constant 0 : i32
    %c0_i32_1 = arith.constant 0 : i32
    return %c0_i32, %c0_i32_0 : i32, i32
  }
  func.func @transform_2(%arg0: i32) -> (i32, i32) {
    %c0_i32 = arith.constant 0 : i32
    %c0_i32_0 = arith.constant 0 : i32
    %c0_i32_1 = arith.constant 0 : i32
    return %c0_i32, %c0_i32_0 : i32, i32
  }
  func.func @transform_3(%arg0: i32) -> (i32, i32) {
    %c0_i32 = arith.constant 0 : i32
    %c0_i32_0 = arith.constant 0 : i32
    %c0_i32_1 = arith.constant 0 : i32
    return %c0_i32, %c0_i32_0 : i32, i32
  }
  func.func @transform_4(%arg0: i32) -> (i32, i32) {
    %c0_i32 = arith.constant 0 : i32
    %c0_i32_0 = arith.constant 0 : i32
    %c0_i32_1 = arith.constant 0 : i32
    return %c0_i32, %c0_i32_0 : i32, i32
  }
  func.func @transform_5(%arg0: i32) -> (i32, i32) {
    %c0_i32 = arith.constant 0 : i32
    %c0_i32_0 = arith.constant 0 : i32
    %c0_i32_1 = arith.constant 0 : i32
    return %c0_i32, %c0_i32_0 : i32, i32
  }
  func.func @transform_6(%arg0: i32) -> (i32, i32) {
    %c0_i32 = arith.constant 0 : i32
    %c0_i32_0 = arith.constant 0 : i32
    %c0_i32_1 = arith.constant 0 : i32
    return %c0_i32, %c0_i32_0 : i32, i32
  }
  func.func @transform_7(%arg0: i32) -> (i32, i32) {
    %c0_i32 = arith.constant 0 : i32
    %c0_i32_0 = arith.constant 0 : i32
    return %c0_i32, %arg0 : i32, i32
  }
}

</mosaic_0001>

<llo_original>
// kernel: tpu_custom_call.1
$region0: #{tpu_custom_call.1}
  #allocation0 [shape = 'u32[]', space=smem, size = 0x4, offset = 0x4, fixed_abs, tag = 'smem constant byte address 0x4 - core index']
  #allocation1 [shape = 'u32[144,128]{1,0:T(1,128)}', space=vmem, size = 0x12000, scoped, tag = 'internal scratch']
  %s0 = inlined_call_operand.hbm [shape: f32[1,256], index: 0, kind: input, shape index: {}]
  %s1 = inlined_call_operand.hbm [shape: f32[8,1], index: 1, kind: input, shape index: {}]
  %s2 = inlined_call_operand.hbm [shape: f32[64,8], index: 2, kind: input, shape index: {}]
  %s3 = inlined_call_operand.hbm [shape: f32[64,8], index: 3, kind: input, shape index: {}]
  %s4 = inlined_call_operand.hbm [shape: f32[64,1], index: 4, kind: input, shape index: {}]
  %s5 = inlined_call_operand.hbm [shape: f32[64,64], index: 5, kind: input, shape index: {}]
  %s6 = inlined_call_operand.hbm [shape: f32[64,1], index: 6, kind: input, shape index: {}]
  %s7 = inlined_call_operand.hbm [shape: f32[64,256], index: 7, kind: output, shape index: {}]
  %s8 = sld [smem:[#allocation0]]
  $region89: #{tpu_custom_call.1} parent=0
    _
  %s10 = ssub.s32 1, %s8
  %s11 = scalar_select 0, %s10, %s8
  $region1: #{tpu_custom_call.1} parent=0
    #allocation2 [shape = 'u8[1024]{0}', space=vmem, size = 0x400, scoped, tag = 'input window, operand 0']
    #allocation3 [shape = 's32[2]{0}', space=sflag, size = 0x8, scoped, tag = 'scoped memory for tpu_custom_call.1']
    #allocation4 [shape = 's32[2]{0}', space=sflag, size = 0x8, scoped, tag = 'scoped memory for tpu_custom_call.1']
    #allocation5 [shape = 'u8[4096]{0}', space=vmem, size = 0x1000, scoped, tag = 'input window, operand 1, single buffered']
    #allocation6 [shape = 's32[1]{0}', space=sflag, size = 0x4, scoped, tag = 'scoped memory for tpu_custom_call.1']
    #allocation7 [shape = 'u8[32768]{0}', space=vmem, size = 0x8000, scoped, tag = 'input window, operand 2, single buffered']
    #allocation8 [shape = 'u8[32768]{0}', space=vmem, size = 0x8000, scoped, tag = 'input window, operand 3, single buffered']
    #allocation9 [shape = 's32[1]{0}', space=sflag, size = 0x4, scoped, tag = 'scoped memory for tpu_custom_call.1']
    #allocation10 [shape = 'u8[32768]{0}', space=vmem, size = 0x8000, scoped, tag = 'input window, operand 4, single buffered']
    #allocation11 [shape = 'u8[32768]{0}', space=vmem, size = 0x8000, scoped, tag = 'input window, operand 5, single buffered']
    #allocation12 [shape = 's32[1]{0}', space=sflag, size = 0x4, scoped, tag = 'scoped memory for tpu_custom_call.1']
    #allocation13 [shape = 'u8[32768]{0}', space=vmem, size = 0x8000, scoped, tag = 'input window, operand 6, single buffered']
    #allocation14 [shape = 'u8[65536]{0}', space=vmem, size = 0x10000, scoped, tag = 'output window, operand 0']
    %12 = vsyncpa [#allocation3], 0
    %s13 = scalar_lea.sflag [#allocation3], 1
    %14 = vsyncpa %s13, 0
    %15 = vsyncpa [#allocation6], 0
    %16 = vsyncpa [#allocation9], 0
    %17 = vsyncpa [#allocation12], 0
    %18 = vsyncpa [#allocation4], 0
    %s19 = scalar_lea.sflag [#allocation4], 1
    %20 = vsyncpa %s19, 0
    loop: start=0, step=1, limit=4
    $region2: #{tpu_custom_call.1} parent=1 // loop_pre_header
      _
    $region3: #{tpu_custom_call.1} parent=1 // loop_header
      %s22 = sphi 0, %s26
      %p23 = scmp.ge.s32.totalorder %s22, 4
      %s32 = sphi 0, %s34
      %s35 = sphi 0, %s32
      %s36 = sphi 0, %s35
      %s52 = sphi 0, %s36
      %s56 = sphi 0, %s56
      %s58 = sphi 0, %s56
      %s59 = sphi 0, %s58
      %s73 = sphi 0, %s59
      %s77 = sphi 0, %s77
      %s79 = sphi 0, %s77
      %s80 = sphi 0, %s79
      %s94 = sphi 0, %s80
      %s98 = sphi 0, %s98
      %s100 = sphi 0, %s98
      %s101 = sphi 0, %s100
      %s115 = sphi 0, %s101
      %s119 = sphi 0, %s119
      %s121 = sphi 0, %s119
      %s122 = sphi 0, %s121
      %s136 = sphi 0, %s122
      %s140 = sphi 0, %s140
      %s142 = sphi 0, %s140
      %s143 = sphi 0, %s142
      %s157 = sphi 0, %s143
      %s161 = sphi 0, %s161
      %s163 = sphi 0, %s161
      %s164 = sphi 0, %s163
      %s178 = sphi 0, %s164
      %s184 = sphi 0, %s186
      %s187 = sphi 0, %s184
      %s188 = sphi 0, %s187
      %s204 = sphi 0, %s188
    $region4: #{tpu_custom_call.1} parent=1 // loop_header_branch
      %25 = sbr.rel (%p23) target = $region8
    $region5: #{tpu_custom_call.1} parent=1 // loop_body
      %s27 = ssub.s32 %s22, 1
      %s28 = ssub.s32 %s22, 2
      %s29 = sadd.s32 %s22, 1
      %s30 = ssub.s32 %s22, %s29
      %p31 = scmp.eq.s32.totalorder %s30, 0
      %s33 = sadd.s32 %s32, 1
      %s34 = scalar_select %p31, %s32, %s33
      %p37 = pneg %p31
      %p38 = scmp.eq.s32.totalorder %s22, 1
      %p39 = por %p37, %p38
      %p40 = scmp.ne.s32.totalorder %s32, %s35
      %p41 = scmp.eq.s32.totalorder %s22, 0
      %p42 = por %p40, %p41
      %p43 = scmp.ne.s32.totalorder %s32, %s35
      %p44 = scmp.eq.s32.totalorder %s27, 1
      %p45 = por %p43, %p44
      %p46 = scmp.ne.s32.totalorder %s35, %s36
      %p47 = scmp.eq.s32.totalorder %s27, 0
      %p48 = por %p46, %p47
      %p49 = scmp.ne.s32.totalorder %s35, %s36
      %p50 = scmp.eq.s32.totalorder %s28, 1
      %p51 = por %p49, %p50
      %p53 = scmp.ne.s32.totalorder %s36, %s52
      %p54 = scmp.eq.s32.totalorder %s28, 0
      %p55 = por %p53, %p54
      %s57 = sadd.s32 %s56, 1
      %p60 = scmp.eq.s32.totalorder %s22, 1
      %p61 = scmp.ne.s32.totalorder %s56, %s58
      %p62 = scmp.eq.s32.totalorder %s22, 0
      %p63 = por %p61, %p62
      %p64 = scmp.ne.s32.totalorder %s56, %s58
      %p65 = scmp.eq.s32.totalorder %s27, 1
      %p66 = por %p64, %p65
      %p67 = scmp.ne.s32.totalorder %s58, %s59
      %p68 = scmp.eq.s32.totalorder %s27, 0
      %p69 = por %p67, %p68
      %p70 = scmp.ne.s32.totalorder %s58, %s59
      %p71 = scmp.eq.s32.totalorder %s28, 1
      %p72 = por %p70, %p71
      %p74 = scmp.ne.s32.totalorder %s59, %s73
      %p75 = scmp.eq.s32.totalorder %s28, 0
      %p76 = por %p74, %p75
      %s78 = sadd.s32 %s77, 1
      %p81 = scmp.eq.s32.totalorder %s22, 1
      %p82 = scmp.ne.s32.totalorder %s77, %s79
      %p83 = scmp.eq.s32.totalorder %s22, 0
      %p84 = por %p82, %p83
      %p85 = scmp.ne.s32.totalorder %s77, %s79
      %p86 = scmp.eq.s32.totalorder %s27, 1
      %p87 = por %p85, %p86
      %p88 = scmp.ne.s32.totalorder %s79, %s80
      %p89 = scmp.eq.s32.totalorder %s27, 0
      %p90 = por %p88, %p89
      %p91 = scmp.ne.s32.totalorder %s79, %s80
      %p92 = scmp.eq.s32.totalorder %s28, 1
      %p93 = por %p91, %p92
      %p95 = scmp.ne.s32.totalorder %s80, %s94
      %p96 = scmp.eq.s32.totalorder %s28, 0
      %p97 = por %p95, %p96
      %s99 = sadd.s32 %s98, 1
      %p102 = scmp.eq.s32.totalorder %s22, 1
      %p103 = scmp.ne.s32.totalorder %s98, %s100
      %p104 = scmp.eq.s32.totalorder %s22, 0
      %p105 = por %p103, %p104
      %p106 = scmp.ne.s32.totalorder %s98, %s100
      %p107 = scmp.eq.s32.totalorder %s27, 1
      %p108 = por %p106, %p107
      %p109 = scmp.ne.s32.totalorder %s100, %s101
      %p110 = scmp.eq.s32.totalorder %s27, 0
      %p111 = por %p109, %p110
      %p112 = scmp.ne.s32.totalorder %s100, %s101
      %p113 = scmp.eq.s32.totalorder %s28, 1
      %p114 = por %p112, %p113
      %p116 = scmp.ne.s32.totalorder %s101, %s115
      %p117 = scmp.eq.s32.totalorder %s28, 0
      %p118 = por %p116, %p117
      %s120 = sadd.s32 %s119, 1
      %p123 = scmp.eq.s32.totalorder %s22, 1
      %p124 = scmp.ne.s32.totalorder %s119, %s121
      %p125 = scmp.eq.s32.totalorder %s22, 0
      %p126 = por %p124, %p125
      %p127 = scmp.ne.s32.totalorder %s119, %s121
      %p128 = scmp.eq.s32.totalorder %s27, 1
      %p129 = por %p127, %p128
      %p130 = scmp.ne.s32.totalorder %s121, %s122
      %p131 = scmp.eq.s32.totalorder %s27, 0
      %p132 = por %p130, %p131
      %p133 = scmp.ne.s32.totalorder %s121, %s122
      %p134 = scmp.eq.s32.totalorder %s28, 1
      %p135 = por %p133, %p134
      %p137 = scmp.ne.s32.totalorder %s122, %s136
      %p138 = scmp.eq.s32.totalorder %s28, 0
      %p139 = por %p137, %p138
      %s141 = sadd.s32 %s140, 1
      %p144 = scmp.eq.s32.totalorder %s22, 1
      %p145 = scmp.ne.s32.totalorder %s140, %s142
      %p146 = scmp.eq.s32.totalorder %s22, 0
      %p147 = por %p145, %p146
      %p148 = scmp.ne.s32.totalorder %s140, %s142
      %p149 = scmp.eq.s32.totalorder %s27, 1
      %p150 = por %p148, %p149
      %p151 = scmp.ne.s32.totalorder %s142, %s143
      %p152 = scmp.eq.s32.totalorder %s27, 0
      %p153 = por %p151, %p152
      %p154 = scmp.ne.s32.totalorder %s142, %s143
      %p155 = scmp.eq.s32.totalorder %s28, 1
      %p156 = por %p154, %p155
      %p158 = scmp.ne.s32.totalorder %s143, %s157
      %p159 = scmp.eq.s32.totalorder %s28, 0
      %p160 = por %p158, %p159
      %s162 = sadd.s32 %s161, 1
      %p165 = scmp.eq.s32.totalorder %s22, 1
      %p166 = scmp.ne.s32.totalorder %s161, %s163
      %p167 = scmp.eq.s32.totalorder %s22, 0
      %p168 = por %p166, %p167
      %p169 = scmp.ne.s32.totalorder %s161, %s163
      %p170 = scmp.eq.s32.totalorder %s27, 1
      %p171 = por %p169, %p170
      %p172 = scmp.ne.s32.totalorder %s163, %s164
      %p173 = scmp.eq.s32.totalorder %s27, 0
      %p174 = por %p172, %p173
      %p175 = scmp.ne.s32.totalorder %s163, %s164
      %p176 = scmp.eq.s32.totalorder %s28, 1
      %p177 = por %p175, %p176
      %p179 = scmp.ne.s32.totalorder %s164, %s178
      %p180 = scmp.eq.s32.totalorder %s28, 0
      %p181 = por %p179, %p180
      %s182 = ssub.s32 %s22, %s29
      %p183 = scmp.eq.s32.totalorder %s182, 0
      %s185 = sadd.s32 %s184, 1
      %s186 = scalar_select %p183, %s184, %s185
      %p189 = pneg %p183
      %p190 = scmp.eq.s32.totalorder %s22, 1
      %p191 = por %p189, %p190
      %p192 = scmp.ne.s32.totalorder %s184, %s187
      %p193 = scmp.eq.s32.totalorder %s22, 0
      %p194 = por %p192, %p193
      %p195 = scmp.ne.s32.totalorder %s184, %s187
      %p196 = scmp.eq.s32.totalorder %s27, 1
      %p197 = por %p195, %p196
      %p198 = scmp.ne.s32.totalorder %s187, %s188
      %p199 = scmp.eq.s32.totalorder %s27, 0
      %p200 = por %p198, %p199
      %p201 = scmp.ne.s32.totalorder %s187, %s188
      %p202 = scmp.eq.s32.totalorder %s28, 1
      %p203 = por %p201, %p202
      %p205 = scmp.ne.s32.totalorder %s188, %s204
      %p206 = scmp.eq.s32.totalorder %s28, 0
      %p207 = por %p205, %p206
      %p208 = scmp.le.s32.totalorder 1, %s22
      %p209 = scmp.lt.s32.totalorder %s22, 3
      %p210 = pnand %p208, %p209
      %p211 = pneg %p210
      // Predicated region
      $region9: #{tpu_custom_call.1} parent=5 // pred_check
        _
      $region10: #{tpu_custom_call.1} parent=5 // pred_check_branch
        %213 = sbr.rel (%p210) target = $region12
      $region11: #{tpu_custom_call.1} parent=5 // pred_region
        %s214 = ssub.s32 %s22, 1
        // Predicated region
        $region13: #{tpu_custom_call.1} parent=11 // pred_check
          %p215 = pneg %p69
        $region14: #{tpu_custom_call.1} parent=11 // pred_check_branch
          %217 = sbr.rel (%p215) target = $region16
        $region15: #{tpu_custom_call.1} parent=11 // pred_region
          %s219 = ssub.s32 128, 128
          %220 = vsyncadd [#allocation6], %s219
          %s222 = sshll.u32 [#allocation5], 4
          %s223 = int_to_ptr.vmem [resolvable:$true] %s222
          %225 = dma.hbm_to_vmem [thread:$0]  %s1, 128, %s223, [#allocation6]
        $region16: #{tpu_custom_call.1} parent=11 // pred_fallthru
          _
        // Predicated region
        $region17: #{tpu_custom_call.1} parent=11 // pred_check
          %p226 = pneg %p90
        $region18: #{tpu_custom_call.1} parent=11 // pred_check_branch
          %228 = sbr.rel (%p226) target = $region20
        $region19: #{tpu_custom_call.1} parent=11 // pred_region
          %s230 = ssub.s32 1024, 1024
          %231 = vsyncadd [#allocation6], %s230
          %s232 = sshll.u32 [#allocation7], 4
          %s233 = int_to_ptr.vmem [resolvable:$true] %s232
          %238 = dma.hbm_to_vmem [thread:$0]  %s2, 1024, %s233, [#allocation6], 128, 128, 8
        $region20: #{tpu_custom_call.1} parent=11 // pred_fallthru
          _
        // Predicated region
        $region21: #{tpu_custom_call.1} parent=11 // pred_check
          %p239 = pneg %p111
        $region22: #{tpu_custom_call.1} parent=11 // pred_check_branch
          %241 = sbr.rel (%p239) target = $region24
        $region23: #{tpu_custom_call.1} parent=11 // pred_region
          %s243 = ssub.s32 1024, 1024
          %244 = vsyncadd [#allocation9], %s243
          %s245 = sshll.u32 [#allocation8], 4
          %s246 = int_to_ptr.vmem [resolvable:$true] %s245
          %251 = dma.hbm_to_vmem [thread:$0]  %s3, 1024, %s246, [#allocation9], 128, 128, 8
        $region24: #{tpu_custom_call.1} parent=11 // pred_fallthru
          _
        // Predicated region
        $region25: #{tpu_custom_call.1} parent=11 // pred_check
          %p252 = pneg %p132
        $region26: #{tpu_custom_call.1} parent=11 // pred_check_branch
          %254 = sbr.rel (%p252) target = $region28
        $region27: #{tpu_custom_call.1} parent=11 // pred_region
          %s256 = ssub.s32 1024, 1024
          %257 = vsyncadd [#allocation9], %s256
          %s258 = sshll.u32 [#allocation10], 4
          %s259 = int_to_ptr.vmem [resolvable:$true] %s258
          %264 = dma.hbm_to_vmem [thread:$0]  %s4, 1024, %s259, [#allocation9], 128, 128, 8
        $region28: #{tpu_custom_call.1} parent=11 // pred_fallthru
          _
        // Predicated region
        $region29: #{tpu_custom_call.1} parent=11 // pred_check
          %p265 = pneg %p153
        $region30: #{tpu_custom_call.1} parent=11 // pred_check_branch
          %267 = sbr.rel (%p265) target = $region32
        $region31: #{tpu_custom_call.1} parent=11 // pred_region
          %s269 = ssub.s32 1024, 1024
          %270 = vsyncadd [#allocation12], %s269
          %s271 = sshll.u32 [#allocation11], 4
          %s272 = int_to_ptr.vmem [resolvable:$true] %s271
          %277 = dma.hbm_to_vmem [thread:$0]  %s5, 1024, %s272, [#allocation12], 128, 128, 8
        $region32: #{tpu_custom_call.1} parent=11 // pred_fallthru
          _
        // Predicated region
        $region33: #{tpu_custom_call.1} parent=11 // pred_check
          %p278 = pneg %p174
        $region34: #{tpu_custom_call.1} parent=11 // pred_check_branch
          %280 = sbr.rel (%p278) target = $region36
        $region35: #{tpu_custom_call.1} parent=11 // pred_region
          %s282 = ssub.s32 1024, 1024
          %283 = vsyncadd [#allocation12], %s282
          %s284 = sshll.u32 [#allocation13], 4
          %s285 = int_to_ptr.vmem [resolvable:$true] %s284
          %290 = dma.hbm_to_vmem [thread:$0]  %s6, 1024, %s285, [#allocation12], 128, 128, 8
        $region36: #{tpu_custom_call.1} parent=11 // pred_fallthru
          _
      $region12: #{tpu_custom_call.1} parent=5 // pred_fallthru
        _
      %p291 = scmp.lt.s32.totalorder %s22, 2
      // Predicated region
      $region37: #{tpu_custom_call.1} parent=5 // pred_check
        %p292 = pneg %p291
      $region38: #{tpu_custom_call.1} parent=5 // pred_check_branch
        %294 = sbr.rel (%p292) target = $region40
      $region39: #{tpu_custom_call.1} parent=5 // pred_region
        // Predicated region
        $region41: #{tpu_custom_call.1} parent=39 // pred_check
          %p295 = pneg %p42
        $region42: #{tpu_custom_call.1} parent=39 // pred_check_branch
          %297 = sbr.rel (%p295) target = $region44
        $region43: #{tpu_custom_call.1} parent=39 // pred_region
          %s298 = sand.u32 %s32, 1
          %s299 = scalar_lea.sflag [#allocation3], %s298
          %s300 = sand.u32 %s32, 1
          %s301 = scalar_lea.vmem [#allocation2], %s300
          %s303 = ssub.s32 16, 16
          %304 = vsyncadd %s299, %s303
          %s305 = smul.addr %s22, 16
          %s306 = scalar_lea.hbm %s0, %s305
          %s308 = sshll.u32 %s301, 4
          %s309 = int_to_ptr.vmem [resolvable:$true] %s308
          %311 = dma.hbm_to_vmem [thread:$0]  %s306, 16, %s309, %s299
        $region44: #{tpu_custom_call.1} parent=39 // pred_fallthru
          _
      $region40: #{tpu_custom_call.1} parent=5 // pred_fallthru
        _
      %p312 = scmp.le.s32.totalorder 1, %s22
      %p313 = scmp.lt.s32.totalorder %s22, 3
      %p314 = pnand %p312, %p313
      %p315 = pneg %p314
      // Predicated region
      $region45: #{tpu_custom_call.1} parent=5 // pred_check
        _
      $region46: #{tpu_custom_call.1} parent=5 // pred_check_branch
        %317 = sbr.rel (%p314) target = $region48
      $region47: #{tpu_custom_call.1} parent=5 // pred_region
        %s318 = ssub.s32 %s22, 1
        %s319 = sand.u32 %s35, 1
        %s320 = scalar_lea.sflag [#allocation3], %s319
        %s321 = sand.u32 %s35, 1
        %s322 = scalar_lea.vmem [#allocation2], %s321
        // Predicated region
        $region49: #{tpu_custom_call.1} parent=47 // pred_check
          %p323 = pneg %p48
        $region50: #{tpu_custom_call.1} parent=47 // pred_check_branch
          %325 = sbr.rel (%p323) target = $region52
        $region51: #{tpu_custom_call.1} parent=47 // pred_region
          %326 = dma.done %s320, 16
        $region52: #{tpu_custom_call.1} parent=47 // pred_fallthru
          _
        // Predicated region
        $region53: #{tpu_custom_call.1} parent=47 // pred_check
          %p327 = pneg %p69
        $region54: #{tpu_custom_call.1} parent=47 // pred_check_branch
          %329 = sbr.rel (%p327) target = $region56
        $region55: #{tpu_custom_call.1} parent=47 // pred_region
          %330 = dma.done [#allocation6], 128
        $region56: #{tpu_custom_call.1} parent=47 // pred_fallthru
          _
        // Predicated region
        $region57: #{tpu_custom_call.1} parent=47 // pred_check
          %p331 = pneg %p90
        $region58: #{tpu_custom_call.1} parent=47 // pred_check_branch
          %333 = sbr.rel (%p331) target = $region60
        $region59: #{tpu_custom_call.1} parent=47 // pred_region
          %334 = dma.done [#allocation6], 1024
        $region60: #{tpu_custom_call.1} parent=47 // pred_fallthru
          _
        // Predicated region
        $region61: #{tpu_custom_call.1} parent=47 // pred_check
          %p335 = pneg %p111
        $region62: #{tpu_custom_call.1} parent=47 // pred_check_branch
          %337 = sbr.rel (%p335) target = $region64
        $region63: #{tpu_custom_call.1} parent=47 // pred_region
          %338 = dma.done [#allocation9], 1024
        $region64: #{tpu_custom_call.1} parent=47 // pred_fallthru
          _
        // Predicated region
        $region65: #{tpu_custom_call.1} parent=47 // pred_check
          %p339 = pneg %p132
        $region66: #{tpu_custom_call.1} parent=47 // pred_check_branch
          %341 = sbr.rel (%p339) target = $region68
        $region67: #{tpu_custom_call.1} parent=47 // pred_region
          %342 = dma.done [#allocation9], 1024
        $region68: #{tpu_custom_call.1} parent=47 // pred_fallthru
          _
        // Predicated region
        $region69: #{tpu_custom_call.1} parent=47 // pred_check
          %p343 = pneg %p153
        $region70: #{tpu_custom_call.1} parent=47 // pred_check_branch
          %345 = sbr.rel (%p343) target = $region72
        $region71: #{tpu_custom_call.1} parent=47 // pred_region
          %346 = dma.done [#allocation12], 1024
        $region72: #{tpu_custom_call.1} parent=47 // pred_fallthru
          _
        // Predicated region
        $region73: #{tpu_custom_call.1} parent=47 // pred_check
          %p347 = pneg %p174
        $region74: #{tpu_custom_call.1} parent=47 // pred_check_branch
          %349 = sbr.rel (%p347) target = $region76
        $region75: #{tpu_custom_call.1} parent=47 // pred_region
          %350 = dma.done [#allocation12], 1024
        $region76: #{tpu_custom_call.1} parent=47 // pred_fallthru
          _
        %s351 = sand.u32 %s35, 1
        %s352 = scalar_lea.sflag [#allocation3], %s351
        %s353 = sand.u32 %s35, 1
        %s354 = scalar_lea.vmem [#allocation2], %s353
        %p355 = pneg %p48
        %p356 = pneg %p45
        %p357 = pneg %p69
        %p358 = pneg %p66
        %p359 = pneg %p90
        %p360 = pneg %p87
        %p361 = pneg %p111
        %p362 = pneg %p108
        %p363 = pneg %p132
        %p364 = pneg %p129
        %p365 = pneg %p153
        %p366 = pneg %p150
        %p367 = pneg %p174
        %p368 = pneg %p171
        %p369 = pneg %p200
        %p370 = pneg %p197
        %s371 = sand.u32 %s187, 1
        %s372 = scalar_lea.sflag [#allocation4], %s371
        %s373 = sand.u32 %s187, 1
        %s374 = smul.addr %s373, 64
        %s375 = scalar_lea.vmem [#allocation14], %s374
        %v376 = vld [vmem:[%s322] sm:$0x1]
        %v377 = vld [vmem:[#allocation5] sm:$0xff]
        %379 = vset.pattern.permute.xlu0 0
        %380 = vperm.xlu0 %379, %v377
        %v381 = vpop.permute.xlu0 %380
        %v384 = vlaneseq
        %v385 = vshrl.u32 %v384, 7
        %v386 = vsub.s32 0, %v385
        %v387 = vrot.slane %v376, %v386
        %v389 = vmul.f32 %v381, %v387
        %v390 = vld [vmem:[#allocation7] sm:$0xff]
        %v391 = vld [vmem:[#allocation7 + $0x8] sm:$0xff]
        %v392 = vld [vmem:[#allocation7 + $0x10] sm:$0xff]
        %v393 = vld [vmem:[#allocation7 + $0x18] sm:$0xff]
        %v394 = vld [vmem:[#allocation7 + $0x20] sm:$0xff]
        %v395 = vld [vmem:[#allocation7 + $0x28] sm:$0xff]
        %v396 = vld [vmem:[#allocation7 + $0x30] sm:$0xff]
        %v397 = vld [vmem:[#allocation7 + $0x38] sm:$0xff]
        %v398 = vand.u32 2147483647, %v389
        %vm399 = vcmp.le.f32.partialorder %v398, 0.7853982
        %vm400 = vcmp.lt.s32.totalorder %v389, 0
        %v401 = vand.u32 %v389, 2139095040
        %v402 = vshrl.u32 %v401, 23
        %v403 = vsub.s32 %v402, 127
        %v404 = vand.u32 2147483647, %v389
        %v405 = vand.u32 %v404, 8388607
        %v406 = vor.u32 %v405, 8388608
        %v407 = vsub.s32 0, %v406
        %v408 = vadd.s32 %v403, 1
        %vm409 = vcmp.gt.s32.totalorder %v408, 0
        %v410 = vsel %vm409, %v408, 0
        %v411 = vshrl.u32 %v410, 5
        %v412 = vand.u32 %v410, 31
        %v413 = vsub.s32 32, %v412
        %v414 = vshrl.u32 683565275, %v413
        %v415 = vshll.u32 683565275, %v412
        %v416 = vshrl.u32 2475754826, %v413
        %v417 = vor.u32 %v415, %v416
        %v418 = vshll.u32 2475754826, %v412
        %v419 = vshrl.u32 2131351028, %v413
        %v420 = vor.u32 %v418, %v419
        %v421 = vshll.u32 2131351028, %v412
        %v422 = vshrl.u32 2102212464, %v413
        %v423 = vor.u32 %v421, %v422
        %v424 = vshll.u32 2102212464, %v412
        %v425 = vshrl.u32 920167782, %v413
        %v426 = vor.u32 %v424, %v425
        %v427 = vshll.u32 920167782, %v412
        %v428 = vshrl.u32 1326507024, %v413
        %v429 = vor.u32 %v427, %v428
        %vm430 = vcmp.lt.s32.totalorder %v411, 1
        %vm431 = vcmp.lt.s32.totalorder %v411, 2
        %vm432 = vcmp.lt.s32.totalorder %v411, 3
        %vm433 = vcmp.lt.s32.totalorder %v411, 4
        %v434 = vsel %vm430, %v414, %v417
        %v435 = vsel %vm433, %v423, 2102212464
        %v436 = vsel %vm432, %v420, %v435
        %v437 = vsel %vm431, %v434, %v436
        %v438 = vsel %vm430, %v417, %v420
        %v439 = vsel %vm433, %v426, 920167782
        %v440 = vsel %vm432, %v423, %v439
        %v441 = vsel %vm431, %v438, %v440
        %v442 = vsel %vm430, %v420, %v423
        %v443 = vsel %vm433, %v429, 1326507024
        %v444 = vsel %vm432, %v426, %v443
        %v445 = vsel %vm431, %v442, %v444
        %v446 = vshll.u32 %v406, 8
        %v447 = vmul.u32.u64.compose %v446, %v445
        %v448 = vextract.low.u32 %v447
        %v449 = vextract.high.u32 %v447
        %v450 = vmul.u32.u64.compose %v446, %v441
        %v451 = vextract.low.u32 %v450
        %v452 = vextract.high.u32 %v450
        %v453 = vmul.u32 %v446, %v437
        %v454 = vadd.s32 %v449, %v451
        %vm455 = vc.u32 %v449, %v451
        %v456 = vadd.s32 %v452, 1
        %v457 = vsel %vm455, %v456, %v452
        %v458 = vadd.s32 %v453, %v457
        %v459 = vadd.s32 %v458, 536870912
        %v460 = vshrl.u32 %v459, 30
        %v461 = vshll.u32 %v460, 30
        %v462 = vsub.s32 %v458, %v461
        %vm463 = vcmp.lt.s32.totalorder %v462, 0
        %v464 = vsub.s32 0, %v462
        %v465 = vsel %vm463, %v464, %v462
        %v466 = vclz %v465
        %v467 = vsub.s32 %v466, 2
        %vm468 = vcmp.gt.s32.totalorder 0, %v467
        %v469 = vsel %vm468, 0, %v467
        %v470 = vsub.s32 32, %v469
        %v471 = vshll.u32 %v462, %v469
        %v472 = vshrl.u32 %v454, %v470
        %v473 = vor.u32 %v471, %v472
        %v474 = vsub.s32 4294967266, %v469
        %v475 = vadd.s32 %v474, 127
        %v476 = vshll.u32 %v475, 23
        %v477 = vor.u32 4788187, %v476
        %v478 = vand.u32 2147483647, %v477
        %v480 = vcvt.s32.f32 %v473
        %v481 = vmul.f32 %v480, %v478
        %v482 = vxor.u32 %v481, 2147483648
        %v483 = vsel %vm400, %v482, %v481
        %v484 = vsub.s32 4, %v460
        %v485 = vsel %vm400, %v484, %v460
        %v486 = vsel %vm399, %v389, %v483
        %v487 = vsel %vm399, 0, %v485
        %v488 = vcosq.f32.pop %v486
        %v489 = vsinq.f32.pop %v486
        %vm490 = vweird.f32 %v389
        %v491 = vadd.s32 %v487, 3
        %v492 = vand.u32 %v491, 3
        %vm493 = vcmp.lt.s32.totalorder %v492, 2
        %vm494 = vcmp.eq.s32.totalorder %v492, 0
        %v495 = vxor.u32 %v489, 2147483648
        %v496 = vsel %vm494, %v488, %v495
        %vm497 = vcmp.eq.s32.totalorder %v492, 2
        %v498 = vxor.u32 %v488, 2147483648
        %v499 = vsel %vm497, %v498, %v489
        %v500 = vsel %vm493, %v496, %v499
        %v501 = vsel %vm490, nan, %v500
        %v502 = vld [vmem:[#allocation8] sm:$0xff]
        %v503 = vld [vmem:[#allocation8 + $0x8] sm:$0xff]
        %v504 = vld [vmem:[#allocation8 + $0x10] sm:$0xff]
        %v505 = vld [vmem:[#allocation8 + $0x18] sm:$0xff]
        %v506 = vld [vmem:[#allocation8 + $0x20] sm:$0xff]
        %v507 = vld [vmem:[#allocation8 + $0x28] sm:$0xff]
        %v508 = vld [vmem:[#allocation8 + $0x30] sm:$0xff]
        %v509 = vld [vmem:[#allocation8 + $0x38] sm:$0xff]
        %v510 = vand.u32 2147483647, %v389
        %vm511 = vcmp.le.f32.partialorder %v510, 0.7853982
        %vm512 = vcmp.lt.s32.totalorder %v389, 0
        %v513 = vand.u32 %v389, 2139095040
        %v514 = vshrl.u32 %v513, 23
        %v515 = vsub.s32 %v514, 127
        %v516 = vand.u32 2147483647, %v389
        %v517 = vand.u32 %v516, 8388607
        %v518 = vor.u32 %v517, 8388608
        %v519 = vsub.s32 0, %v518
        %v520 = vadd.s32 %v515, 1
        %vm521 = vcmp.gt.s32.totalorder %v520, 0
        %v522 = vsel %vm521, %v520, 0
        %v523 = vshrl.u32 %v522, 5
        %v524 = vand.u32 %v522, 31
        %v525 = vsub.s32 32, %v524
        %v526 = vshrl.u32 683565275, %v525
        %v527 = vshll.u32 683565275, %v524
        %v528 = vshrl.u32 2475754826, %v525
        %v529 = vor.u32 %v527, %v528
        %v530 = vshll.u32 2475754826, %v524
        %v531 = vshrl.u32 2131351028, %v525
        %v532 = vor.u32 %v530, %v531
        %v533 = vshll.u32 2131351028, %v524
        %v534 = vshrl.u32 2102212464, %v525
        %v535 = vor.u32 %v533, %v534
        %v536 = vshll.u32 2102212464, %v524
        %v537 = vshrl.u32 920167782, %v525
        %v538 = vor.u32 %v536, %v537
        %v539 = vshll.u32 920167782, %v524
        %v540 = vshrl.u32 1326507024, %v525
        %v541 = vor.u32 %v539, %v540
        %vm542 = vcmp.lt.s32.totalorder %v523, 1
        %vm543 = vcmp.lt.s32.totalorder %v523, 2
        %vm544 = vcmp.lt.s32.totalorder %v523, 3
        %vm545 = vcmp.lt.s32.totalorder %v523, 4
        %v546 = vsel %vm542, %v526, %v529
        %v547 = vsel %vm545, %v535, 2102212464
        %v548 = vsel %vm544, %v532, %v547
        %v549 = vsel %vm543, %v546, %v548
        %v550 = vsel %vm542, %v529, %v532
        %v551 = vsel %vm545, %v538, 920167782
        %v552 = vsel %vm544, %v535, %v551
        %v553 = vsel %vm543, %v550, %v552
        %v554 = vsel %vm542, %v532, %v535
        %v555 = vsel %vm545, %v541, 1326507024
        %v556 = vsel %vm544, %v538, %v555
        %v557 = vsel %vm543, %v554, %v556
        %v558 = vshll.u32 %v518, 8
        %v559 = vmul.u32.u64.compose %v558, %v557
        %v560 = vextract.low.u32 %v559
        %v561 = vextract.high.u32 %v559
        %v562 = vmul.u32.u64.compose %v558, %v553
        %v563 = vextract.low.u32 %v562
        %v564 = vextract.high.u32 %v562
        %v565 = vmul.u32 %v558, %v549
        %v566 = vadd.s32 %v561, %v563
        %vm567 = vc.u32 %v561, %v563
        %v568 = vadd.s32 %v564, 1
        %v569 = vsel %vm567, %v568, %v564
        %v570 = vadd.s32 %v565, %v569
        %v571 = vadd.s32 %v570, 536870912
        %v572 = vshrl.u32 %v571, 30
        %v573 = vshll.u32 %v572, 30
        %v574 = vsub.s32 %v570, %v573
        %vm575 = vcmp.lt.s32.totalorder %v574, 0
        %v576 = vsub.s32 0, %v574
        %v577 = vsel %vm575, %v576, %v574
        %v578 = vclz %v577
        %v579 = vsub.s32 %v578, 2
        %vm580 = vcmp.gt.s32.totalorder 0, %v579
        %v581 = vsel %vm580, 0, %v579
        %v582 = vsub.s32 32, %v581
        %v583 = vshll.u32 %v574, %v581
        %v584 = vshrl.u32 %v566, %v582
        %v585 = vor.u32 %v583, %v584
        %v586 = vsub.s32 4294967266, %v581
        %v587 = vadd.s32 %v586, 127
        %v588 = vshll.u32 %v587, 23
        %v589 = vor.u32 4788187, %v588
        %v590 = vand.u32 2147483647, %v589
        %v592 = vcvt.s32.f32 %v585
        %v593 = vmul.f32 %v592, %v590
        %v594 = vxor.u32 %v593, 2147483648
        %v595 = vsel %vm512, %v594, %v593
        %v596 = vsub.s32 4, %v572
        %v597 = vsel %vm512, %v596, %v572
        %v598 = vsel %vm511, %v389, %v595
        %v599 = vsel %vm511, 0, %v597
        %v600 = vcosq.f32.pop %v598
        %v601 = vsinq.f32.pop %v598
        %vm602 = vweird.f32 %v389
        %v603 = vand.u32 %v599, 3
        %vm604 = vcmp.lt.s32.totalorder %v603, 2
        %vm605 = vcmp.eq.s32.totalorder %v603, 0
        %v606 = vxor.u32 %v601, 2147483648
        %v607 = vsel %vm605, %v600, %v606
        %vm608 = vcmp.eq.s32.totalorder %v603, 2
        %v609 = vxor.u32 %v600, 2147483648
        %v610 = vsel %vm608, %v609, %v601
        %v611 = vsel %vm604, %v607, %v610
        %v612 = vsel %vm602, nan, %v611
        %vm613 = vcmask 64512
        %v615 = vsel %vm613, %v502, 0
        %v618 = vsel %vm613, %v503, 0
        %v621 = vsel %vm613, %v504, 0
        %v624 = vsel %vm613, %v505, 0
        %v627 = vsel %vm613, %v506, 0
        %v630 = vsel %vm613, %v507, 0
        %v633 = vsel %vm613, %v508, 0
        %v636 = vsel %vm613, %v509, 0
        %638 = vmatprep.subr.mxu0 0.0
        %639 = vmatpush1.msra.mxu0 %v612
        %640 = vmatprep.subr.mxu0 0.0
        %641 = vmatpush1.msra.mxu0 0.0
        %642 = vmatprep.subr.mxu0 0.0
        %643 = vmatpush1.msra.mxu0 0.0
        %644 = vmatprep.subr.mxu0 0.0
        %645 = vmatpush1.msra.mxu0 0.0
        %646 = vmatprep.subr.mxu0 0.0
        %647 = vmatpush1.msra.mxu0 0.0
        %648 = vmatprep.subr.mxu0 0.0
        %649 = vmatpush1.msra.mxu0 0.0
        %650 = vmatprep.subr.mxu0 0.0
        %651 = vmatpush1.msra.mxu0 0.0
        %652 = vmatprep.subr.mxu0 0.0
        %653 = vmatpush1.msra.mxu0 0.0
        %654 = vmatprep.subr.mxu0 0.0
        %655 = vmatpush1.msra.mxu0 0.0
        %656 = vmatprep.subr.mxu0 0.0
        %657 = vmatpush1.msra.mxu0 0.0
        %658 = vmatprep.subr.mxu0 0.0
        %659 = vmatpush1.msra.mxu0 0.0
        %660 = vmatprep.subr.mxu0 0.0
        %661 = vmatpush1.msra.mxu0 0.0
        %662 = vmatprep.subr.mxu0 0.0
        %663 = vmatpush1.msra.mxu0 0.0
        %664 = vmatprep.subr.mxu0 0.0
        %665 = vmatpush1.msra.mxu0 0.0
        %666 = vmatprep.subr.mxu0 0.0
        %667 = vmatpush1.msra.mxu0 0.0
        %668 = vmatprep.subr.mxu0 0.0
        %669 = vmatpush1.msra.mxu0 0.0
        %670 = vmatprep.subr.mxu0 0.0
        %671 = vmatpush1.msra.mxu0 0.0
        %672 = vmatprep.subr.mxu0 0.0
        %673 = vmatpush1.msra.mxu0 0.0
        %674 = vmatprep.subr.mxu0 0.0
        %675 = vmatpush1.msra.mxu0 0.0
        %676 = vmatprep.subr.mxu0 0.0
        %677 = vmatpush1.msra.mxu0 0.0
        %678 = vmatprep.subr.mxu0 0.0
        %679 = vmatpush1.msra.mxu0 0.0
        %680 = vmatprep.subr.mxu0 0.0
        %681 = vmatpush1.msra.mxu0 0.0
        %682 = vmatprep.subr.mxu0 0.0
        %683 = vmatpush1.msra.mxu0 0.0
        %684 = vmatprep.subr.mxu0 0.0
        %685 = vmatpush1.msra.mxu0 0.0
        %686 = vmatprep.subr.mxu0 0.0
        %687 = vmatpush1.msra.mxu0 0.0
        %688 = vmatprep.subr.mxu0 0.0
        %689 = vmatpush1.msra.mxu0 0.0
        %690 = vmatprep.subr.mxu0 0.0
        %691 = vmatpush1.msra.mxu0 0.0
        %692 = vmatprep.subr.mxu0 0.0
        %693 = vmatpush1.msra.mxu0 0.0
        %694 = vmatprep.subr.mxu0 0.0
        %695 = vmatpush1.msra.mxu0 0.0
        %696 = vmatprep.subr.mxu0 0.0
        %697 = vmatpush1.msra.mxu0 0.0
        %698 = vmatprep.subr.mxu0 0.0
        %699 = vmatpush1.msra.mxu0 0.0
        %700 = vmatprep.subr.mxu0 0.0
        %701 = vmatpush1.msra.mxu0 0.0
        %702 = vmatprep.mubr.f32.mxu0 0.0
        %703 = vmatmul.mubr.f32.gmra.mrb[0].mxu0 %v615
        %v704 = vpop.f32.mrb[0].mxu0
        %v705 = vadd.f32 0.0, %v704
        %v706 = vpop.f32.mrb[0].mxu0
        %707 = vmatprep.mubr.f32.mxu0 0.0
        %708 = vmatmul.mubr.f32.gmra.mrb[0].mxu0 %v618
        %v709 = vpop.f32.mrb[0].mxu0
        %v710 = vadd.f32 0.0, %v709
        %v711 = vpop.f32.mrb[0].mxu0
        %712 = vmatprep.mubr.f32.mxu0 0.0
        %713 = vmatmul.mubr.f32.gmra.mrb[0].mxu0 %v621
        %v714 = vpop.f32.mrb[0].mxu0
        %v715 = vadd.f32 0.0, %v714
        %v716 = vpop.f32.mrb[0].mxu0
        %717 = vmatprep.mubr.f32.mxu0 0.0
        %718 = vmatmul.mubr.f32.gmra.mrb[0].mxu0 %v624
        %v719 = vpop.f32.mrb[0].mxu0
        %v720 = vadd.f32 0.0, %v719
        %v721 = vpop.f32.mrb[0].mxu0
        %722 = vmatprep.mubr.f32.mxu0 0.0
        %723 = vmatmul.mubr.f32.gmra.mrb[0].mxu0 %v627
        %v724 = vpop.f32.mrb[0].mxu0
        %v725 = vadd.f32 0.0, %v724
        %v726 = vpop.f32.mrb[0].mxu0
        %727 = vmatprep.mubr.f32.mxu0 0.0
        %728 = vmatmul.mubr.f32.gmra.mrb[0].mxu0 %v630
        %v729 = vpop.f32.mrb[0].mxu0
        %v730 = vadd.f32 0.0, %v729
        %v731 = vpop.f32.mrb[0].mxu0
        %732 = vmatprep.mubr.f32.mxu0 0.0
        %733 = vmatmul.mubr.f32.gmra.mrb[0].mxu0 %v633
        %v734 = vpop.f32.mrb[0].mxu0
        %v735 = vadd.f32 0.0, %v734
        %v736 = vpop.f32.mrb[0].mxu0
        %737 = vmatprep.mubr.f32.mxu0 0.0
        %738 = vmatmul.mubr.f32.gmra.mrb[0].mxu0 %v636
        %v739 = vpop.f32.mrb[0].mxu0
        %v740 = vadd.f32 0.0, %v739
        %v741 = vpop.f32.mrb[0].mxu0
        %742 = vdwg.mxu0
        %v744 = vsel %vm613, %v390, 0
        %v747 = vsel %vm613, %v391, 0
        %v750 = vsel %vm613, %v392, 0
        %v753 = vsel %vm613, %v393, 0
        %v756 = vsel %vm613, %v394, 0
        %v759 = vsel %vm613, %v395, 0
        %v762 = vsel %vm613, %v396, 0
        %v765 = vsel %vm613, %v397, 0
        %767 = vmatprep.subr.mxu0 0.0
        %768 = vmatpush1.msra.mxu0 %v501
        %769 = vmatprep.subr.mxu0 0.0
        %770 = vmatpush1.msra.mxu0 0.0
        %771 = vmatprep.subr.mxu0 0.0
        %772 = vmatpush1.msra.mxu0 0.0
        %773 = vmatprep.subr.mxu0 0.0
        %774 = vmatpush1.msra.mxu0 0.0
        %775 = vmatprep.subr.mxu0 0.0
        %776 = vmatpush1.msra.mxu0 0.0
        %777 = vmatprep.subr.mxu0 0.0
        %778 = vmatpush1.msra.mxu0 0.0
        %779 = vmatprep.subr.mxu0 0.0
        %780 = vmatpush1.msra.mxu0 0.0
        %781 = vmatprep.subr.mxu0 0.0
        %782 = vmatpush1.msra.mxu0 0.0
        %783 = vmatprep.subr.mxu0 0.0
        %784 = vmatpush1.msra.mxu0 0.0
        %785 = vmatprep.subr.mxu0 0.0
        %786 = vmatpush1.msra.mxu0 0.0
        %787 = vmatprep.subr.mxu0 0.0
        %788 = vmatpush1.msra.mxu0 0.0
        %789 = vmatprep.subr.mxu0 0.0
        %790 = vmatpush1.msra.mxu0 0.0
        %791 = vmatprep.subr.mxu0 0.0
        %792 = vmatpush1.msra.mxu0 0.0
        %793 = vmatprep.subr.mxu0 0.0
        %794 = vmatpush1.msra.mxu0 0.0
        %795 = vmatprep.subr.mxu0 0.0
        %796 = vmatpush1.msra.mxu0 0.0
        %797 = vmatprep.subr.mxu0 0.0
        %798 = vmatpush1.msra.mxu0 0.0
        %799 = vmatprep.subr.mxu0 0.0
        %800 = vmatpush1.msra.mxu0 0.0
        %801 = vmatprep.subr.mxu0 0.0
        %802 = vmatpush1.msra.mxu0 0.0
        %803 = vmatprep.subr.mxu0 0.0
        %804 = vmatpush1.msra.mxu0 0.0
        %805 = vmatprep.subr.mxu0 0.0
        %806 = vmatpush1.msra.mxu0 0.0
        %807 = vmatprep.subr.mxu0 0.0
        %808 = vmatpush1.msra.mxu0 0.0
        %809 = vmatprep.subr.mxu0 0.0
        %810 = vmatpush1.msra.mxu0 0.0
        %811 = vmatprep.subr.mxu0 0.0
        %812 = vmatpush1.msra.mxu0 0.0
        %813 = vmatprep.subr.mxu0 0.0
        %814 = vmatpush1.msra.mxu0 0.0
        %815 = vmatprep.subr.mxu0 0.0
        %816 = vmatpush1.msra.mxu0 0.0
        %817 = vmatprep.subr.mxu0 0.0
        %818 = vmatpush1.msra.mxu0 0.0
        %819 = vmatprep.subr.mxu0 0.0
        %820 = vmatpush1.msra.mxu0 0.0
        %821 = vmatprep.subr.mxu0 0.0
        %822 = vmatpush1.msra.mxu0 0.0
        %823 = vmatprep.subr.mxu0 0.0
        %824 = vmatpush1.msra.mxu0 0.0
        %825 = vmatprep.subr.mxu0 0.0
        %826 = vmatpush1.msra.mxu0 0.0
        %827 = vmatprep.subr.mxu0 0.0
        %828 = vmatpush1.msra.mxu0 0.0
        %829 = vmatprep.subr.mxu0 0.0
        %830 = vmatpush1.msra.mxu0 0.0
        %831 = vmatprep.mubr.f32.mxu0 0.0
        %832 = vmatmul.mubr.f32.gmra.mrb[0].mxu0 %v744
        %v833 = vpop.f32.mrb[0].mxu0
        %v834 = vadd.f32 %v705, %v833
        %v835 = vpop.f32.mrb[0].mxu0
        %836 = vmatprep.mubr.f32.mxu0 0.0
        %837 = vmatmul.mubr.f32.gmra.mrb[0].mxu0 %v747
        %v838 = vpop.f32.mrb[0].mxu0
        %v839 = vadd.f32 %v710, %v838
        %v840 = vpop.f32.mrb[0].mxu0
        %841 = vmatprep.mubr.f32.mxu0 0.0
        %842 = vmatmul.mubr.f32.gmra.mrb[0].mxu0 %v750
        %v843 = vpop.f32.mrb[0].mxu0
        %v844 = vadd.f32 %v715, %v843
        %v845 = vpop.f32.mrb[0].mxu0
        %846 = vmatprep.mubr.f32.mxu0 0.0
        %847 = vmatmul.mubr.f32.gmra.mrb[0].mxu0 %v753
        %v848 = vpop.f32.mrb[0].mxu0
        %v849 = vadd.f32 %v720, %v848
        %v850 = vpop.f32.mrb[0].mxu0
        %851 = vmatprep.mubr.f32.mxu0 0.0
        %852 = vmatmul.mubr.f32.gmra.mrb[0].mxu0 %v756
        %v853 = vpop.f32.mrb[0].mxu0
        %v854 = vadd.f32 %v725, %v853
        %v855 = vpop.f32.mrb[0].mxu0
        %856 = vmatprep.mubr.f32.mxu0 0.0
        %857 = vmatmul.mubr.f32.gmra.mrb[0].mxu0 %v759
        %v858 = vpop.f32.mrb[0].mxu0
        %v859 = vadd.f32 %v730, %v858
        %v860 = vpop.f32.mrb[0].mxu0
        %861 = vmatprep.mubr.f32.mxu0 0.0
        %862 = vmatmul.mubr.f32.gmra.mrb[0].mxu0 %v762
        %v863 = vpop.f32.mrb[0].mxu0
        %v864 = vadd.f32 %v735, %v863
        %v865 = vpop.f32.mrb[0].mxu0
        %866 = vmatprep.mubr.f32.mxu0 0.0
        %867 = vmatmul.mubr.f32.gmra.mrb[0].mxu0 %v765
        %v868 = vpop.f32.mrb[0].mxu0
        %v869 = vadd.f32 %v740, %v868
        %v870 = vpop.f32.mrb[0].mxu0
        %871 = vdwg.mxu0
        %v872 = vld [vmem:[#allocation10] sm:$0xff]
        %v873 = vld [vmem:[#allocation10 + $0x8] sm:$0xff]
        %v874 = vld [vmem:[#allocation10 + $0x10] sm:$0xff]
        %v875 = vld [vmem:[#allocation10 + $0x18] sm:$0xff]
        %v876 = vld [vmem:[#allocation10 + $0x20] sm:$0xff]
        %v877 = vld [vmem:[#allocation10 + $0x28] sm:$0xff]
        %v878 = vld [vmem:[#allocation10 + $0x30] sm:$0xff]
        %v879 = vld [vmem:[#allocation10 + $0x38] sm:$0xff]
        %881 = vset.pattern.permute.xlu0 0
        %882 = vperm.xlu0 %881, %v872
        %v883 = vpop.permute.xlu0 %882
        %886 = vset.pattern.permute.xlu0 0
        %887 = vperm.xlu0 %886, %v873
        %v888 = vpop.permute.xlu0 %887
        %891 = vset.pattern.permute.xlu0 0
        %892 = vperm.xlu0 %891, %v874
        %v893 = vpop.permute.xlu0 %892
        %896 = vset.pattern.permute.xlu0 0
        %897 = vperm.xlu0 %896, %v875
        %v898 = vpop.permute.xlu0 %897
        %901 = vset.pattern.permute.xlu0 0
        %902 = vperm.xlu0 %901, %v876
        %v903 = vpop.permute.xlu0 %902
        %906 = vset.pattern.permute.xlu0 0
        %907 = vperm.xlu0 %906, %v877
        %v908 = vpop.permute.xlu0 %907
        %911 = vset.pattern.permute.xlu0 0
        %912 = vperm.xlu0 %911, %v878
        %v913 = vpop.permute.xlu0 %912
        %916 = vset.pattern.permute.xlu0 0
        %917 = vperm.xlu0 %916, %v879
        %v918 = vpop.permute.xlu0 %917
        %v920 = vadd.f32 %v834, %v883
        %v921 = vadd.f32 %v839, %v888
        %v922 = vadd.f32 %v844, %v893
        %v923 = vadd.f32 %v849, %v898
        %v924 = vadd.f32 %v854, %v903
        %v925 = vadd.f32 %v859, %v908
        %v926 = vadd.f32 %v864, %v913
        %v927 = vadd.f32 %v869, %v918
        %v928 = vxor.u32 %v920, 2147483648
        %v929 = vxor.u32 %v921, 2147483648
        %v930 = vxor.u32 %v922, 2147483648
        %v931 = vxor.u32 %v923, 2147483648
        %v932 = vxor.u32 %v924, 2147483648
        %v933 = vxor.u32 %v925, 2147483648
        %v934 = vxor.u32 %v926, 2147483648
        %v935 = vxor.u32 %v927, 2147483648
        %v936 = vmul.f32 %v928, 1.442695
        %v937 = vpow.pop %v936
        %v938 = vmul.f32 %v929, 1.442695
        %v939 = vpow.pop %v938
        %v940 = vmul.f32 %v930, 1.442695
        %v941 = vpow.pop %v940
        %v942 = vmul.f32 %v931, 1.442695
        %v943 = vpow.pop %v942
        %v944 = vmul.f32 %v932, 1.442695
        %v945 = vpow.pop %v944
        %v946 = vmul.f32 %v933, 1.442695
        %v947 = vpow.pop %v946
        %v948 = vmul.f32 %v934, 1.442695
        %v949 = vpow.pop %v948
        %v950 = vmul.f32 %v935, 1.442695
        %v951 = vpow.pop %v950
        %v952 = vadd.f32 %v937, 1.0
        %v953 = vadd.f32 %v939, 1.0
        %v954 = vadd.f32 %v941, 1.0
        %v955 = vadd.f32 %v943, 1.0
        %v956 = vadd.f32 %v945, 1.0
        %v957 = vadd.f32 %v947, 1.0
        %v958 = vadd.f32 %v949, 1.0
        %v959 = vadd.f32 %v951, 1.0
        %v960 = vrcp.pop %v952
        %v961 = vmul.f32 1.0, %v960
        %v962 = vrcp.pop %v953
        %v963 = vmul.f32 1.0, %v962
        %v964 = vrcp.pop %v954
        %v965 = vmul.f32 1.0, %v964
        %v966 = vrcp.pop %v955
        %v967 = vmul.f32 1.0, %v966
        %v968 = vrcp.pop %v956
        %v969 = vmul.f32 1.0, %v968
        %v970 = vrcp.pop %v957
        %v971 = vmul.f32 1.0, %v970
        %v972 = vrcp.pop %v958
        %v973 = vmul.f32 1.0, %v972
        %v974 = vrcp.pop %v959
        %v975 = vmul.f32 1.0, %v974
        %v976 = vmul.f32 %v920, %v961
        %v977 = vmul.f32 %v921, %v963
        %v978 = vmul.f32 %v922, %v965
        %v979 = vmul.f32 %v923, %v967
        %v980 = vmul.f32 %v924, %v969
        %v981 = vmul.f32 %v925, %v971
        %v982 = vmul.f32 %v926, %v973
        %v983 = vmul.f32 %v927, %v975
        %v984 = vld [vmem:[#allocation11] sm:$0xff]
        %v985 = vld [vmem:[#allocation11 + $0x8] sm:$0xff]
        %v986 = vld [vmem:[#allocation11 + $0x10] sm:$0xff]
        %v987 = vld [vmem:[#allocation11 + $0x18] sm:$0xff]
        %v988 = vld [vmem:[#allocation11 + $0x20] sm:$0xff]
        %v989 = vld [vmem:[#allocation11 + $0x28] sm:$0xff]
        %v990 = vld [vmem:[#allocation11 + $0x30] sm:$0xff]
        %v991 = vld [vmem:[#allocation11 + $0x38] sm:$0xff]
        %v992 = vld [vmem:[#allocation13] sm:$0xff]
        %v993 = vld [vmem:[#allocation13 + $0x8] sm:$0xff]
        %v994 = vld [vmem:[#allocation13 + $0x10] sm:$0xff]
        %v995 = vld [vmem:[#allocation13 + $0x18] sm:$0xff]
        %v996 = vld [vmem:[#allocation13 + $0x20] sm:$0xff]
        %v997 = vld [vmem:[#allocation13 + $0x28] sm:$0xff]
        %v998 = vld [vmem:[#allocation13 + $0x30] sm:$0xff]
        %v999 = vld [vmem:[#allocation13 + $0x38] sm:$0xff]
        %1001 = vset.pattern.permute.xlu0 0
        %1002 = vperm.xlu0 %1001, %v992
        %v1003 = vpop.permute.xlu0 %1002
        %1006 = vset.pattern.permute.xlu0 0
        %1007 = vperm.xlu0 %1006, %v993
        %v1008 = vpop.permute.xlu0 %1007
        %1011 = vset.pattern.permute.xlu0 0
        %1012 = vperm.xlu0 %1011, %v994
        %v1013 = vpop.permute.xlu0 %1012
        %1016 = vset.pattern.permute.xlu0 0
        %1017 = vperm.xlu0 %1016, %v995
        %v1018 = vpop.permute.xlu0 %1017
        %1021 = vset.pattern.permute.xlu0 0
        %1022 = vperm.xlu0 %1021, %v996
        %v1023 = vpop.permute.xlu0 %1022
        %1026 = vset.pattern.permute.xlu0 0
        %1027 = vperm.xlu0 %1026, %v997
        %v1028 = vpop.permute.xlu0 %1027
        %1031 = vset.pattern.permute.xlu0 0
        %1032 = vperm.xlu0 %1031, %v998
        %v1033 = vpop.permute.xlu0 %1032
        %1036 = vset.pattern.permute.xlu0 0
        %1037 = vperm.xlu0 %1036, %v999
        %v1038 = vpop.permute.xlu0 %1037
        %vm1040 = vcmask 523264
        %v1042 = vsel %vm1040, %v984, 0
        %v1045 = vsel %vm1040, %v985, 0
        %v1048 = vsel %vm1040, %v986, 0
        %v1051 = vsel %vm1040, %v987, 0
        %v1054 = vsel %vm1040, %v988, 0
        %v1057 = vsel %vm1040, %v989, 0
        %v1060 = vsel %vm1040, %v990, 0
        %v1063 = vsel %vm1040, %v991, 0
        %1065 = vmatprep.subr.mxu0 0.0
        %1066 = vmatpush1.msra.mxu0 %v976
        %1067 = vmatprep.subr.mxu0 0.0
        %1068 = vmatpush1.msra.mxu0 %v977
        %1069 = vmatprep.subr.mxu0 0.0
        %1070 = vmatpush1.msra.mxu0 %v978
        %1071 = vmatprep.subr.mxu0 0.0
        %1072 = vmatpush1.msra.mxu0 %v979
        %1073 = vmatprep.subr.mxu0 0.0
        %1074 = vmatpush1.msra.mxu0 %v980
        %1075 = vmatprep.subr.mxu0 0.0
        %1076 = vmatpush1.msra.mxu0 %v981
        %1077 = vmatprep.subr.mxu0 0.0
        %1078 = vmatpush1.msra.mxu0 %v982
        %1079 = vmatprep.subr.mxu0 0.0
        %1080 = vmatpush1.msra.mxu0 %v983
        %1081 = vmatprep.subr.mxu0 0.0
        %1082 = vmatpush1.msra.mxu0 0.0
        %1083 = vmatprep.subr.mxu0 0.0
        %1084 = vmatpush1.msra.mxu0 0.0
        %1085 = vmatprep.subr.mxu0 0.0
        %1086 = vmatpush1.msra.mxu0 0.0
        %1087 = vmatprep.subr.mxu0 0.0
        %1088 = vmatpush1.msra.mxu0 0.0
        %1089 = vmatprep.subr.mxu0 0.0
        %1090 = vmatpush1.msra.mxu0 0.0
        %1091 = vmatprep.subr.mxu0 0.0
        %1092 = vmatpush1.msra.mxu0 0.0
        %1093 = vmatprep.subr.mxu0 0.0
        %1094 = vmatpush1.msra.mxu0 0.0
        %1095 = vmatprep.subr.mxu0 0.0
        %1096 = vmatpush1.msra.mxu0 0.0
        %1097 = vmatprep.subr.mxu0 0.0
        %1098 = vmatpush1.msra.mxu0 0.0
        %1099 = vmatprep.subr.mxu0 0.0
        %1100 = vmatpush1.msra.mxu0 0.0
        %1101 = vmatprep.subr.mxu0 0.0
        %1102 = vmatpush1.msra.mxu0 0.0
        %1103 = vmatprep.subr.mxu0 0.0
        %1104 = vmatpush1.msra.mxu0 0.0
        %1105 = vmatprep.subr.mxu0 0.0
        %1106 = vmatpush1.msra.mxu0 0.0
        %1107 = vmatprep.subr.mxu0 0.0
        %1108 = vmatpush1.msra.mxu0 0.0
        %1109 = vmatprep.subr.mxu0 0.0
        %1110 = vmatpush1.msra.mxu0 0.0
        %1111 = vmatprep.subr.mxu0 0.0
        %1112 = vmatpush1.msra.mxu0 0.0
        %1113 = vmatprep.subr.mxu0 0.0
        %1114 = vmatpush1.msra.mxu0 0.0
        %1115 = vmatprep.subr.mxu0 0.0
        %1116 = vmatpush1.msra.mxu0 0.0
        %1117 = vmatprep.subr.mxu0 0.0
        %1118 = vmatpush1.msra.mxu0 0.0
        %1119 = vmatprep.subr.mxu0 0.0
        %1120 = vmatpush1.msra.mxu0 0.0
        %1121 = vmatprep.subr.mxu0 0.0
        %1122 = vmatpush1.msra.mxu0 0.0
        %1123 = vmatprep.subr.mxu0 0.0
        %1124 = vmatpush1.msra.mxu0 0.0
        %1125 = vmatprep.subr.mxu0 0.0
        %1126 = vmatpush1.msra.mxu0 0.0
        %1127 = vmatprep.subr.mxu0 0.0
        %1128 = vmatpush1.msra.mxu0 0.0
        %1129 = vmatprep.mubr.f32.mxu0 0.0
        %1130 = vmatmul.mubr.f32.gmra.mrb[0].mxu0 %v1042
        %v1131 = vpop.f32.mrb[0].mxu0
        %v1132 = vadd.f32 %v1003, %v1131
        %v1133 = vpop.f32.mrb[0].mxu0
        %1134 = vmatprep.mubr.f32.mxu0 0.0
        %1135 = vmatmul.mubr.f32.gmra.mrb[0].mxu0 %v1045
        %v1136 = vpop.f32.mrb[0].mxu0
        %v1137 = vadd.f32 %v1008, %v1136
        %v1138 = vpop.f32.mrb[0].mxu0
        %1139 = vmatprep.mubr.f32.mxu0 0.0
        %1140 = vmatmul.mubr.f32.gmra.mrb[0].mxu0 %v1048
        %v1141 = vpop.f32.mrb[0].mxu0
        %v1142 = vadd.f32 %v1013, %v1141
        %v1143 = vpop.f32.mrb[0].mxu0
        %1144 = vmatprep.mubr.f32.mxu0 0.0
        %1145 = vmatmul.mubr.f32.gmra.mrb[0].mxu0 %v1051
        %v1146 = vpop.f32.mrb[0].mxu0
        %v1147 = vadd.f32 %v1018, %v1146
        %v1148 = vpop.f32.mrb[0].mxu0
        %1149 = vmatprep.mubr.f32.mxu0 0.0
        %1150 = vmatmul.mubr.f32.gmra.mrb[0].mxu0 %v1054
        %v1151 = vpop.f32.mrb[0].mxu0
        %v1152 = vadd.f32 %v1023, %v1151
        %v1153 = vpop.f32.mrb[0].mxu0
        %1154 = vmatprep.mubr.f32.mxu0 0.0
        %1155 = vmatmul.mubr.f32.gmra.mrb[0].mxu0 %v1057
        %v1156 = vpop.f32.mrb[0].mxu0
        %v1157 = vadd.f32 %v1028, %v1156
        %v1158 = vpop.f32.mrb[0].mxu0
        %1159 = vmatprep.mubr.f32.mxu0 0.0
        %1160 = vmatmul.mubr.f32.gmra.mrb[0].mxu0 %v1060
        %v1161 = vpop.f32.mrb[0].mxu0
        %v1162 = vadd.f32 %v1033, %v1161
        %v1163 = vpop.f32.mrb[0].mxu0
        %1164 = vmatprep.mubr.f32.mxu0 0.0
        %1165 = vmatmul.mubr.f32.gmra.mrb[0].mxu0 %v1063
        %v1166 = vpop.f32.mrb[0].mxu0
        %v1167 = vadd.f32 %v1038, %v1166
        %v1168 = vpop.f32.mrb[0].mxu0
        %1169 = vdwg.mxu0
        %1170 = vst [vmem:[%s375] sm:$0xff] %v1132
        %1171 = vst [vmem:[%s375 + $0x8] sm:$0xff] %v1137
        %1172 = vst [vmem:[%s375 + $0x10] sm:$0xff] %v1142
        %1173 = vst [vmem:[%s375 + $0x18] sm:$0xff] %v1147
        %1174 = vst [vmem:[%s375 + $0x20] sm:$0xff] %v1152
        %1175 = vst [vmem:[%s375 + $0x28] sm:$0xff] %v1157
        %1176 = vst [vmem:[%s375 + $0x30] sm:$0xff] %v1162
        %1177 = vst [vmem:[%s375 + $0x38] sm:$0xff] %v1167
        %s1178 = sand.u32 %s187, 1
        %s1179 = scalar_lea.sflag [#allocation4], %s1178
        %s1180 = sand.u32 %s187, 1
        %s1181 = smul.addr %s1180, 64
        %s1182 = scalar_lea.vmem [#allocation14], %s1181
        // Predicated region
        $region77: #{tpu_custom_call.1} parent=47 // pred_check
          %p1183 = pneg %p197
        $region78: #{tpu_custom_call.1} parent=47 // pred_check_branch
          %1185 = sbr.rel (%p1183) target = $region80
        $region79: #{tpu_custom_call.1} parent=47 // pred_region
          %s1187 = ssub.s32 1024, 1024
          %1188 = vsyncadd %s1179, %s1187
          %s1189 = smul.addr %s27, 128
          %s1190 = scalar_lea.hbm %s7, %s1189
          %s1191 = sshll.u32 %s1182, 4
          %s1192 = int_to_ptr.vmem [resolvable:$true] %s1191
          %1197 = dma.vmem_to_hbm [thread:$0]  %s1192, 1024, %s1190, %s1179, 128, 256, 8
        $region80: #{tpu_custom_call.1} parent=47 // pred_fallthru
          _
      $region48: #{tpu_custom_call.1} parent=5 // pred_fallthru
        _
      %p1198 = scmp.le.s32.totalorder 2, %s22
      // Predicated region
      $region81: #{tpu_custom_call.1} parent=5 // pred_check
        %p1199 = pneg %p1198
      $region82: #{tpu_custom_call.1} parent=5 // pred_check_branch
        %1201 = sbr.rel (%p1199) target = $region84
      $region83: #{tpu_custom_call.1} parent=5 // pred_region
        %s1202 = ssub.s32 %s22, 2
        // Predicated region
        $region85: #{tpu_custom_call.1} parent=83 // pred_check
          %p1203 = pneg %p203
        $region86: #{tpu_custom_call.1} parent=83 // pred_check_branch
          %1205 = sbr.rel (%p1203) target = $region88
        $region87: #{tpu_custom_call.1} parent=83 // pred_region
          %s1206 = sand.u32 %s188, 1
          %s1207 = scalar_lea.sflag [#allocation4], %s1206
          %s1208 = sand.u32 %s188, 1
          %s1209 = smul.addr %s1208, 64
          %s1210 = scalar_lea.vmem [#allocation14], %s1209
          %1211 = dma.done %s1207, 1024
        $region88: #{tpu_custom_call.1} parent=83 // pred_fallthru
          _
      $region84: #{tpu_custom_call.1} parent=5 // pred_fallthru
        _
    $region6: #{tpu_custom_call.1} parent=1 // loop_footer
      %s26 = sadd.s32 1, %s22
    $region7: #{tpu_custom_call.1} parent=1 // loop_footer_branch
      %21 = sbr.rel target = $region3
    $region8: #{tpu_custom_call.1} parent=1 // loop_exit
      _
    %1212 = vsyncpa [#allocation3], 1
    %s1213 = scalar_lea.sflag [#allocation3], 1
    %1214 = vsyncpa %s1213, 1
    %1215 = vsyncpa [#allocation6], 1
    %1216 = vsyncpa [#allocation9], 1
    %1217 = vsyncpa [#allocation12], 1
    %1218 = vsyncpa [#allocation4], 1
    %s1219 = scalar_lea.sflag [#allocation4], 1
    %1220 = vsyncpa %s1219, 1

</llo_original>
